<compile_context>
chip_gen: v6e
topology: v6e:2x2x1
jax: 0.10.0
libtpu: 0.0.40
codegen_flags: <defaults>
</compile_context>

<pallas_src>
import functools

import jax
import jax.numpy as jnp
from jax.experimental import pallas as pl
from jax.experimental.pallas import tpu as pltpu

LANE = 128        # lane width: hidden dim padded to this (weights only)
SUBLANE = 8       # f32 sublane granularity for the batch dim
MIN_SPLIT_ROWS = 256   # only split a single tile in two (v7x megacore) if each half has >= this many rows


def _round_up(n, m):
    return ((n + m - 1) // m) * m


# ----------------------------- Pallas kernel ------------------------------ #
def _vae_fwd_kernel(x_ref,
                    w1_ref, b1_ref,      # encoder hidden              (x_dim -> hp)
                    w23_ref, b23_ref,    # fused enc-mean / dec-hidden (hp -> hp)
                    w4_ref, b4_ref,      # decoder mean head           (hp -> x_dim)
                    out_ref):
    cdt = w1_ref.dtype                       # matmul input dtype (f32 or bf16)
    x = x_ref[...].astype(cdt)

    # encoder hidden
    h = jnp.dot(x, w1_ref[...], preferred_element_type=jnp.float32) + b1_ref[...]
    h = jnp.maximum(h, 0.0)

    # fused (z = h@w2+b2 ; g = relu(z@w3+b3)) == relu(h@(w2@w3) + (b2@w3+b3))
    g = jnp.dot(h.astype(cdt), w23_ref[...],
                preferred_element_type=jnp.float32) + b23_ref[...]
    g = jnp.maximum(g, 0.0)

    # decoder mean head
    xr = jnp.dot(g.astype(cdt), w4_ref[...],
                 preferred_element_type=jnp.float32) + b4_ref[...]
    out_ref[...] = xr.astype(out_ref.dtype)


# --------------------------- parameter prep -------------------------------- #
def prepare_params(params, compute_dtype=jnp.float32):
    """Fold w2@w3 (in f32), pad the hidden dim to 128 lanes, cast weights.

    Done once. Biases stay f32 (added after the f32 MXU accumulation);
    x_dim is deliberately left unpadded so the streamed x/out tensors carry
    no zero lanes.
    """
    (w1, b1), (w2, b2), (w3, b3), (w4, b4) = params
    x_dim, hidden = w1.shape

    w23 = w2 @ w3                  # (hidden, hidden), folded in f32
    b23 = b2 @ w3 + b3             # (1, hidden)

    hp = _round_up(hidden, LANE)

    def pad(a, rows, cols):
        return jnp.pad(a, ((0, rows - a.shape[0]), (0, cols - a.shape[1])))

    w1p = pad(w1, x_dim, hp).astype(compute_dtype)
    w23p = pad(w23, hp, hp).astype(compute_dtype)
    w4p = pad(w4, hp, x_dim).astype(compute_dtype)
    b1p = pad(b1, 1, hp)
    b23p = pad(b23, 1, hp)
    b4p = b4                        # (1, x_dim), f32
    return (w1p, b1p, w23p, b23p, w4p, b4p)


# ------------------------------- wrapper ----------------------------------- #
@functools.partial(jax.jit, static_argnames=("tile_b",))
def vae_forward_deterministic(x, padded_params, *, tile_b=1024):
    """x: (B, x_dim) float32. Returns reconstruction (B, x_dim) float32."""
    w1p, b1p, w23p, b23p, w4p, b4p = padded_params
    B, x_dim = x.shape
    assert w1p.shape[0] == x_dim, "x_dim mismatch with prepared params"
    hp = w1p.shape[1]

    # Balanced batch tiling: last step nearly full; split a single large tile
    # into 2 so both v7x TensorCores get work; tiny batches run as one step.
    Bp0 = _round_up(B, SUBLANE)
    num_steps = pl.cdiv(Bp0, tile_b)
    if num_steps == 1 and Bp0 >= 2 * MIN_SPLIT_ROWS:
        num_steps = 2
    tile = _round_up(pl.cdiv(Bp0, num_steps), SUBLANE)
    Bp = num_steps * tile

    # Only pad the batch dim, and only when actually required (no lane pad,
    # no extra XLA copy pass in the aligned common case).
    x_in = x if Bp == B else jnp.pad(x, ((0, Bp - B), (0, 0)))

    def wspec(arr):
        # small weights/biases: full-array block, resident across the grid
        return pl.BlockSpec(arr.shape, lambda i: (0, 0))

    wbytes = (w1p.size * w1p.dtype.itemsize
              + w23p.size * w23p.dtype.itemsize
              + w4p.size * w4p.dtype.itemsize)
    bbytes = 4 * (b1p.size + b23p.size + b4p.size)
    flops = 2 * Bp * (x_dim * hp + hp * hp + hp * x_dim)
    bytes_accessed = 4 * 2 * Bp * x_dim + wbytes + bbytes

    out = pl.pallas_call(
        _vae_fwd_kernel,
        out_shape=jax.ShapeDtypeStruct((Bp, x_dim), jnp.float32),
        grid_spec=pltpu.PrefetchScalarGridSpec(
            num_scalar_prefetch=0,
            grid=(num_steps,),
            in_specs=[
                pl.BlockSpec((tile, x_dim), lambda i: (i, 0)),   # x tile (unpadded lanes)
                wspec(w1p), wspec(b1p),
                wspec(w23p), wspec(b23p),
                wspec(w4p), wspec(b4p),
            ],
            out_specs=pl.BlockSpec((tile, x_dim), lambda i: (i, 0)),
        ),
        compiler_params=pltpu.CompilerParams(
            dimension_semantics=("parallel",),     # batch tiles are independent
            vmem_limit_bytes=32 * 1024 * 1024,     # tiles fit with large margin on all gens
        ),
        cost_estimate=pl.CostEstimate(
            flops=flops, transcendentals=0, bytes_accessed=bytes_accessed),
    )(x_in, w1p, b1p, w23p, b23p, w4p, b4p)

    return out if Bp == B else out[:B]


# ------------------------- pure-JAX reference ------------------------------ #
def vae_forward_ref(x, params):
    (w1, b1), (w2, b2), (w3, b3), (w4, b4) = params
    h = jnp.maximum(x @ w1 + b1, 0.0)
    z = h @ w2 + b2                      # qz_x(x).mean
    g = jnp.maximum(z @ w3 + b3, 0.0)
    return g @ w4 + b4                   # px_z(z).mean


# --------------------------- parameter init -------------------------------- #
def init_params(key, x_dim, hidden, z_dim):
    """PyTorch-Linear-style uniform init; weights pre-transposed to (in, out)."""
    def linear(k, fan_in, fan_out):
        kw, kb = jax.random.split(k)
        lim = 1.0 / jnp.sqrt(jnp.float32(fan_in))
        w = jax.random.uniform(kw, (fan_in, fan_out), jnp.float32, -lim, lim)
        b = jax.random.uniform(kb, (1, fan_out), jnp.float32, -lim, lim)
        return w, b

    k1, k2, k3, k4 = jax.random.split(key, 4)
    return (
        linear(k1, x_dim, hidden),   # encoder hidden
        linear(k2, hidden, z_dim),   # encoder mean head
        linear(k3, z_dim, hidden),   # decoder hidden
        linear(k4, hidden, x_dim),   # decoder mean head
    )


# TODO(synk): the stochastic path (deterministic=False, .sample()/.rsample()),
# elbo() (log-prob / KL reductions) and manifold_jac (autograd jacobian) are
# not implemented in-kernel; only the deterministic mean reconstruction is.

if __name__ == "__main__":
    B, X_DIM, HIDDEN, Z_DIM = 8, 64, 32, 16

    key = jax.random.PRNGKey(0)
    kx, kp = jax.random.split(key)
    x = jax.random.normal(kx, (B, X_DIM), dtype=jnp.float32)
    params = init_params(kp, X_DIM, HIDDEN, Z_DIM)

    # f32 path: exact parity with the reference (small batch, single grid step)
    pp_f32 = prepare_params(params, compute_dtype=jnp.float32)
    out = jax.block_until_ready(vae_forward_deterministic(x, pp_f32))
    ref = vae_forward_ref(x, params)
    assert out.shape == (B, X_DIM)
    assert jnp.allclose(out, ref, atol=1e-4, rtol=1e-4), "mismatch vs reference (small B)"

    # larger aligned batch: 2 balanced parallel grid steps, no pad/slice copies
    xb = jax.random.normal(jax.random.PRNGKey(1), (512, X_DIM), dtype=jnp.float32)
    outb = jax.block_until_ready(vae_forward_deterministic(xb, pp_f32))
    refb = vae_forward_ref(xb, params)
    assert outb.shape == (512, X_DIM)
    assert jnp.allclose(outb, refb, atol=1e-4, rtol=1e-4), "mismatch vs reference (large B)"

    # ragged batch: exercises the batch-row padding + trailing slice path
    xr = jax.random.normal(jax.random.PRNGKey(2), (300, X_DIM), dtype=jnp.float32)
    outr = jax.block_until_ready(vae_forward_deterministic(xr, pp_f32))
    refr = vae_forward_ref(xr, params)
    assert outr.shape == (300, X_DIM)
    assert jnp.allclose(outr, refr, atol=1e-4, rtol=1e-4), "mismatch vs reference (ragged B)"

    # bf16 matmul-input path (MXU-native on v6e/v7x), f32 accumulation; looser tolerance
    pp_bf16 = prepare_params(params, compute_dtype=jnp.bfloat16)
    outh = jax.block_until_ready(vae_forward_deterministic(xb, pp_bf16))
    assert jnp.allclose(outh, refb, atol=5e-2, rtol=5e-2), "mismatch vs reference (bf16 path)"

    print("KERNEL_OK")
</pallas_src>

<mosaic_0001>
module attributes {stable_mosaic.version = 11 : i64} {
  func.func @_vae_fwd_kernel(%arg0: i32, %arg1: memref<8x64xf32, #tpu.memory_space<vmem>>, %arg2: memref<64x128xf32, #tpu.memory_space<vmem>>, %arg3: memref<1x128xf32, #tpu.memory_space<vmem>>, %arg4: memref<128x128xf32, #tpu.memory_space<vmem>>, %arg5: memref<1x128xf32, #tpu.memory_space<vmem>>, %arg6: memref<128x64xf32, #tpu.memory_space<vmem>>, %arg7: memref<1x64xf32, #tpu.memory_space<vmem>>, %arg8: memref<8x64xf32, #tpu.memory_space<vmem>>) attributes {dimension_semantics = [#tpu.dimension_semantics<parallel>], iteration_bounds = array<i64: 1>, scalar_prefetch = 0 : i64, scratch_operands = 0 : i64, tpu.core_type = #tpu.core_type<tc>, window_params = [{transform_indices = @transform_0, window_bounds = array<i64: 8, 64>}, {pipeline_mode = #tpu.pipeline_mode<synchronous>, transform_indices = @transform_1, window_bounds = array<i64: 64, 128>}, {pipeline_mode = #tpu.pipeline_mode<synchronous>, transform_indices = @transform_2, window_bounds = array<i64: 1, 128>}, {pipeline_mode = #tpu.pipeline_mode<synchronous>, transform_indices = @transform_3, window_bounds = array<i64: 128, 128>}, {pipeline_mode = #tpu.pipeline_mode<synchronous>, transform_indices = @transform_4, window_bounds = array<i64: 1, 128>}, {pipeline_mode = #tpu.pipeline_mode<synchronous>, transform_indices = @transform_5, window_bounds = array<i64: 128, 64>}, {pipeline_mode = #tpu.pipeline_mode<synchronous>, transform_indices = @transform_6, window_bounds = array<i64: 1, 64>}, {transform_indices = @transform_7, window_bounds = array<i64: 8, 64>}]} {
    %c0 = arith.constant 0 : index
    %c0_0 = arith.constant 0 : index
    %0 = vector.load %arg1[%c0, %c0_0] : memref<8x64xf32, #tpu.memory_space<vmem>>, vector<8x64xf32>
    %c0_1 = arith.constant 0 : index
    %c0_2 = arith.constant 0 : index
    %1 = vector.load %arg2[%c0_1, %c0_2] : memref<64x128xf32, #tpu.memory_space<vmem>>, vector<64x128xf32>
    %cst = arith.constant dense<0.000000e+00> : vector<8x128xf32>
    %2 = tpu.matmul %0, %1, %cst {dimension_numbers = #tpu.dot_dimension_numbers<[1], [0], [0], [1], [0, 0, 1, 1], [], []>} : vector<8x64xf32>, vector<64x128xf32>, vector<8x128xf32> -> vector<8x128xf32>
    %c0_3 = arith.constant 0 : index
    %c0_4 = arith.constant 0 : index
    %3 = vector.load %arg3[%c0_3, %c0_4] : memref<1x128xf32, #tpu.memory_space<vmem>>, vector<1x128xf32>
    %4 = vector.broadcast %3 : vector<1x128xf32> to vector<8x128xf32>
    %5 = arith.addf %2, %4 : vector<8x128xf32>
    %cst_5 = arith.constant 0.000000e+00 : f32
    %6 = vector.broadcast %cst_5 : f32 to vector<8x128xf32>
    %7 = arith.maximumf %5, %6 : vector<8x128xf32>
    %c0_6 = arith.constant 0 : index
    %c0_7 = arith.constant 0 : index
    %8 = vector.load %arg4[%c0_6, %c0_7] : memref<128x128xf32, #tpu.memory_space<vmem>>, vector<128x128xf32>
    %cst_8 = arith.constant dense<0.000000e+00> : vector<8x128xf32>
    %9 = tpu.matmul %7, %8, %cst_8 {dimension_numbers = #tpu.dot_dimension_numbers<[1], [0], [0], [1], [0, 0, 1, 1], [], []>} : vector<8x128xf32>, vector<128x128xf32>, vector<8x128xf32> -> vector<8x128xf32>
    %c0_9 = arith.constant 0 : index
    %c0_10 = arith.constant 0 : index
    %10 = vector.load %arg5[%c0_9, %c0_10] : memref<1x128xf32, #tpu.memory_space<vmem>>, vector<1x128xf32>
    %11 = vector.broadcast %10 : vector<1x128xf32> to vector<8x128xf32>
    %12 = arith.addf %9, %11 : vector<8x128xf32>
    %cst_11 = arith.constant 0.000000e+00 : f32
    %13 = vector.broadcast %cst_11 : f32 to vector<8x128xf32>
    %14 = arith.maximumf %12, %13 : vector<8x128xf32>
    %c0_12 = arith.constant 0 : index
    %c0_13 = arith.constant 0 : index
    %15 = vector.load %arg6[%c0_12, %c0_13] : memref<128x64xf32, #tpu.memory_space<vmem>>, vector<128x64xf32>
    %cst_14 = arith.constant dense<0.000000e+00> : vector<8x64xf32>
    %16 = tpu.matmul %14, %15, %cst_14 {dimension_numbers = #tpu.dot_dimension_numbers<[1], [0], [0], [1], [0, 0, 1, 1], [], []>} : vector<8x128xf32>, vector<128x64xf32>, vector<8x64xf32> -> vector<8x64xf32>
    %c0_15 = arith.constant 0 : index
    %c0_16 = arith.constant 0 : index
    %17 = vector.load %arg7[%c0_15, %c0_16] : memref<1x64xf32, #tpu.memory_space<vmem>>, vector<1x64xf32>
    %18 = vector.broadcast %17 : vector<1x64xf32> to vector<8x64xf32>
    %19 = arith.addf %16, %18 : vector<8x64xf32>
    %c0_17 = arith.constant 0 : index
    %c0_18 = arith.constant 0 : index
    %20 = vector.load %arg8[%c0_17, %c0_18] : memref<8x64xf32, #tpu.memory_space<vmem>>, vector<8x64xf32>
    tpu.vector_store %arg8[%c0_17, %c0_18], %19 {strides = array<i32>} : memref<8x64xf32, #tpu.memory_space<vmem>>, vector<8x64xf32>,
    return
  }
  func.func @transform_0(%arg0: i32) -> (i32, i32) {
    %c0_i32 = arith.constant 0 : i32
    %c0_i32_0 = arith.constant 0 : i32
    return %arg0, %c0_i32 : i32, i32
  }
  func.func @transform_1(%arg0: i32) -> (i32, i32) {
    %c0_i32 = arith.constant 0 : i32
    %c0_i32_0 = arith.constant 0 : i32
    %c0_i32_1 = arith.constant 0 : i32
    return %c0_i32, %c0_i32_0 : i32, i32
  }
  func.func @transform_2(%arg0: i32) -> (i32, i32) {
    %c0_i32 = arith.constant 0 : i32
    %c0_i32_0 = arith.constant 0 : i32
    %c0_i32_1 = arith.constant 0 : i32
    return %c0_i32, %c0_i32_0 : i32, i32
  }
  func.func @transform_3(%arg0: i32) -> (i32, i32) {
    %c0_i32 = arith.constant 0 : i32
    %c0_i32_0 = arith.constant 0 : i32
    %c0_i32_1 = arith.constant 0 : i32
    return %c0_i32, %c0_i32_0 : i32, i32
  }
  func.func @transform_4(%arg0: i32) -> (i32, i32) {
    %c0_i32 = arith.constant 0 : i32
    %c0_i32_0 = arith.constant 0 : i32
    %c0_i32_1 = arith.constant 0 : i32
    return %c0_i32, %c0_i32_0 : i32, i32
  }
  func.func @transform_5(%arg0: i32) -> (i32, i32) {
    %c0_i32 = arith.constant 0 : i32
    %c0_i32_0 = arith.constant 0 : i32
    %c0_i32_1 = arith.constant 0 : i32
    return %c0_i32, %c0_i32_0 : i32, i32
  }
  func.func @transform_6(%arg0: i32) -> (i32, i32) {
    %c0_i32 = arith.constant 0 : i32
    %c0_i32_0 = arith.constant 0 : i32
    %c0_i32_1 = arith.constant 0 : i32
    return %c0_i32, %c0_i32_0 : i32, i32
  }
  func.func @transform_7(%arg0: i32) -> (i32, i32) {
    %c0_i32 = arith.constant 0 : i32
    %c0_i32_0 = arith.constant 0 : i32
    return %arg0, %c0_i32 : i32, i32
  }
}

</mosaic_0001>

<llo_original>
// kernel: vae_forward_deterministic.1
$region0: #{vae_forward_deterministic.1}
  #allocation0 [shape = 'u32[]', space=smem, size = 0x4, offset = 0x4, fixed_abs, tag = 'smem constant byte address 0x4 - core index']
  #allocation1 [shape = 'u32[144,128]{1,0:T(1,128)}', space=vmem, size = 0x12000, scoped, tag = 'internal scratch']
  %s0 = inlined_call_operand.hbm [shape: f32[8,64], index: 0, kind: input, shape index: {}]
  %s1 = inlined_call_operand.vmem [shape: f32[64,128], index: 1, kind: input, shape index: {}]
  %s2 = inlined_call_operand.vmem [shape: f32[1,128], index: 2, kind: input, shape index: {}]
  %s3 = inlined_call_operand.vmem [shape: f32[128,128], index: 3, kind: input, shape index: {}]
  %s4 = inlined_call_operand.vmem [shape: f32[1,128], index: 4, kind: input, shape index: {}]
  %s5 = inlined_call_operand.vmem [shape: f32[128,64], index: 5, kind: input, shape index: {}]
  %s6 = inlined_call_operand.vmem [shape: f32[1,64], index: 6, kind: input, shape index: {}]
  %s7 = inlined_call_operand.hbm [shape: f32[8,64], index: 7, kind: output, shape index: {}]
  %s8 = sld [smem:[#allocation0]]
  $region42: #{vae_forward_deterministic.1} parent=0
    _
  %s10 = ssub.s32 1, %s8
  %s11 = scalar_select 0, %s10, %s8
  $region1: #{vae_forward_deterministic.1} parent=0
    #allocation2 [shape = 'u8[4096]{0}', space=vmem, size = 0x1000, scoped, tag = 'input window, operand 0, single buffered']
    #allocation3 [shape = 's32[1]{0}', space=sflag, size = 0x4, scoped, tag = 'scoped memory for vae_forward_deterministic.1']
    #allocation4 [shape = 's32[1]{0}', space=sflag, size = 0x4, scoped, tag = 'scoped memory for vae_forward_deterministic.1']
    #allocation5 [shape = 'u8[4096]{0}', space=vmem, size = 0x1000, scoped, tag = 'output window, operand 0, single buffered']
    %12 = vsyncpa [#allocation3], 0
    %13 = vsyncpa [#allocation4], 0
    // Predicated region
    $region2: #{vae_forward_deterministic.1} parent=1 // pred_check
      _
    $region3: #{vae_forward_deterministic.1} parent=1 // pred_check_branch
      %15 = sbr.rel (0) target = $region5
    $region4: #{vae_forward_deterministic.1} parent=1 // pred_region
      %s17 = ssub.s32 128, 128
      %18 = vsyncadd [#allocation3], %s17
      %s20 = sshll.u32 [#allocation2], 4
      %s21 = int_to_ptr.vmem [resolvable:$true] %s20
      %23 = dma.hbm_to_vmem [thread:$0]  %s0, 128, %s21, [#allocation3]
    $region5: #{vae_forward_deterministic.1} parent=1 // pred_fallthru
      _
    // Predicated region
    $region6: #{vae_forward_deterministic.1} parent=1 // pred_check
      _
    $region7: #{vae_forward_deterministic.1} parent=1 // pred_check_branch
      %25 = sbr.rel (0) target = $region9
    $region8: #{vae_forward_deterministic.1} parent=1 // pred_region
      _
    $region9: #{vae_forward_deterministic.1} parent=1 // pred_fallthru
      _
    // Predicated region
    $region10: #{vae_forward_deterministic.1} parent=1 // pred_check
      _
    $region11: #{vae_forward_deterministic.1} parent=1 // pred_check_branch
      %27 = sbr.rel (0) target = $region13
    $region12: #{vae_forward_deterministic.1} parent=1 // pred_region
      _
    $region13: #{vae_forward_deterministic.1} parent=1 // pred_fallthru
      _
    // Predicated region
    $region14: #{vae_forward_deterministic.1} parent=1 // pred_check
      _
    $region15: #{vae_forward_deterministic.1} parent=1 // pred_check_branch
      %29 = sbr.rel (0) target = $region17
    $region16: #{vae_forward_deterministic.1} parent=1 // pred_region
      _
    $region17: #{vae_forward_deterministic.1} parent=1 // pred_fallthru
      _
    // Predicated region
    $region18: #{vae_forward_deterministic.1} parent=1 // pred_check
      _
    $region19: #{vae_forward_deterministic.1} parent=1 // pred_check_branch
      %31 = sbr.rel (0) target = $region21
    $region20: #{vae_forward_deterministic.1} parent=1 // pred_region
      _
    $region21: #{vae_forward_deterministic.1} parent=1 // pred_fallthru
      _
    // Predicated region
    $region22: #{vae_forward_deterministic.1} parent=1 // pred_check
      _
    $region23: #{vae_forward_deterministic.1} parent=1 // pred_check_branch
      %33 = sbr.rel (0) target = $region25
    $region24: #{vae_forward_deterministic.1} parent=1 // pred_region
      _
    $region25: #{vae_forward_deterministic.1} parent=1 // pred_fallthru
      _
    // Predicated region
    $region26: #{vae_forward_deterministic.1} parent=1 // pred_check
      _
    $region27: #{vae_forward_deterministic.1} parent=1 // pred_check_branch
      %35 = sbr.rel (0) target = $region29
    $region28: #{vae_forward_deterministic.1} parent=1 // pred_region
      _
    $region29: #{vae_forward_deterministic.1} parent=1 // pred_fallthru
      _
    // Predicated region
    $region30: #{vae_forward_deterministic.1} parent=1 // pred_check
      _
    $region31: #{vae_forward_deterministic.1} parent=1 // pred_check_branch
      %37 = sbr.rel (0) target = $region33
    $region32: #{vae_forward_deterministic.1} parent=1 // pred_region
      %38 = dma.done [#allocation3], 128
    $region33: #{vae_forward_deterministic.1} parent=1 // pred_fallthru
      _
    %v39 = vld [vmem:[#allocation2] sm:$0xff]
    %v40 = vld [vmem:[%s1] sm:$0xff]
    %v41 = vld [vmem:[%s1 + $0x8] sm:$0xff]
    %v42 = vld [vmem:[%s1 + $0x10] sm:$0xff]
    %v43 = vld [vmem:[%s1 + $0x18] sm:$0xff]
    %v44 = vld [vmem:[%s1 + $0x20] sm:$0xff]
    %v45 = vld [vmem:[%s1 + $0x28] sm:$0xff]
    %v46 = vld [vmem:[%s1 + $0x30] sm:$0xff]
    %v47 = vld [vmem:[%s1 + $0x38] sm:$0xff]
    %v48 = vld [vmem:[%s2] sm:$0x1]
    %v50 = vlaneseq
    %v51 = vshrl.u32 %v50, 7
    %v52 = vsub.s32 0, %v51
    %v53 = vrot.slane %v48, %v52
    %vm55 = vcmask 523264
    %v57 = vsel %vm55, %v39, 0
    %59 = vmatprep.subr.mxu0 0.0
    %60 = vmatpush1.msra.mxu0 0.0
    %61 = vmatprep.subr.mxu0 0.0
    %62 = vmatpush1.msra.mxu0 0.0
    %63 = vmatprep.subr.mxu0 0.0
    %64 = vmatpush1.msra.mxu0 0.0
    %65 = vmatprep.subr.mxu0 0.0
    %66 = vmatpush1.msra.mxu0 0.0
    %67 = vmatprep.subr.mxu0 0.0
    %68 = vmatpush1.msra.mxu0 0.0
    %69 = vmatprep.subr.mxu0 0.0
    %70 = vmatpush1.msra.mxu0 0.0
    %71 = vmatprep.subr.mxu0 0.0
    %72 = vmatpush1.msra.mxu0 0.0
    %73 = vmatprep.subr.mxu0 0.0
    %74 = vmatpush1.msra.mxu0 0.0
    %75 = vmatprep.subr.mxu0 0.0
    %76 = vmatpush1.msra.mxu0 %v47
    %77 = vmatprep.subr.mxu0 0.0
    %78 = vmatpush1.msra.mxu0 %v46
    %79 = vmatprep.subr.mxu0 0.0
    %80 = vmatpush1.msra.mxu0 %v45
    %81 = vmatprep.subr.mxu0 0.0
    %82 = vmatpush1.msra.mxu0 %v44
    %83 = vmatprep.subr.mxu0 0.0
    %84 = vmatpush1.msra.mxu0 %v43
    %85 = vmatprep.subr.mxu0 0.0
    %86 = vmatpush1.msra.mxu0 %v42
    %87 = vmatprep.subr.mxu0 0.0
    %88 = vmatpush1.msra.mxu0 %v41
    %89 = vmatprep.subr.mxu0 0.0
    %90 = vmatpush1.msra.mxu0 %v40
    %91 = vmatprep.subr.mxu0 0.0
    %92 = vmatpush2.msra.mxu0 0.0
    %93 = vmatprep.subr.mxu0 0.0
    %94 = vmatpush2.msra.mxu0 0.0
    %95 = vmatprep.subr.mxu0 0.0
    %96 = vmatpush2.msra.mxu0 0.0
    %97 = vmatprep.subr.mxu0 0.0
    %98 = vmatpush2.msra.mxu0 0.0
    %99 = vmatprep.subr.mxu0 0.0
    %100 = vmatpush2.msra.mxu0 0.0
    %101 = vmatprep.subr.mxu0 0.0
    %102 = vmatpush2.msra.mxu0 0.0
    %103 = vmatprep.subr.mxu0 0.0
    %104 = vmatpush2.msra.mxu0 0.0
    %105 = vmatprep.subr.mxu0 0.0
    %106 = vmatpush2.msra.mxu0 0.0
    %107 = vmatprep.subr.mxu0 0.0
    %108 = vmatpush2.msra.mxu0 0.0
    %109 = vmatprep.subr.mxu0 0.0
    %110 = vmatpush2.msra.mxu0 0.0
    %111 = vmatprep.subr.mxu0 0.0
    %112 = vmatpush2.msra.mxu0 0.0
    %113 = vmatprep.subr.mxu0 0.0
    %114 = vmatpush2.msra.mxu0 0.0
    %115 = vmatprep.subr.mxu0 0.0
    %116 = vmatpush2.msra.mxu0 0.0
    %117 = vmatprep.subr.mxu0 0.0
    %118 = vmatpush2.msra.mxu0 0.0
    %119 = vmatprep.subr.mxu0 0.0
    %120 = vmatpush2.msra.mxu0 0.0
    %121 = vmatprep.subr.mxu0 0.0
    %122 = vmatpush2.msra.mxu0 0.0
    %123 = vmatprep.mubr.f32.mxu0 0.0
    %124 = vmatmul.mubr.f32.gmra.mxu0 %v57
    %v125 = vpop.f32.mrf.mxu0
    %v126 = vadd.f32 %v53, %v125
    %v127 = vpop.f32.mrf.mxu0
    %128 = vdwg.mxu0
    %v129 = vmax.f32 %v126, 0.0
    %v130 = vld [vmem:[%s3] sm:$0xff]
    %v131 = vld [vmem:[%s3 + $0x8] sm:$0xff]
    %v132 = vld [vmem:[%s3 + $0x10] sm:$0xff]
    %v133 = vld [vmem:[%s3 + $0x18] sm:$0xff]
    %v134 = vld [vmem:[%s3 + $0x20] sm:$0xff]
    %v135 = vld [vmem:[%s3 + $0x28] sm:$0xff]
    %v136 = vld [vmem:[%s3 + $0x30] sm:$0xff]
    %v137 = vld [vmem:[%s3 + $0x38] sm:$0xff]
    %v138 = vld [vmem:[%s3 + $0x40] sm:$0xff]
    %v139 = vld [vmem:[%s3 + $0x48] sm:$0xff]
    %v140 = vld [vmem:[%s3 + $0x50] sm:$0xff]
    %v141 = vld [vmem:[%s3 + $0x58] sm:$0xff]
    %v142 = vld [vmem:[%s3 + $0x60] sm:$0xff]
    %v143 = vld [vmem:[%s3 + $0x68] sm:$0xff]
    %v144 = vld [vmem:[%s3 + $0x70] sm:$0xff]
    %v145 = vld [vmem:[%s3 + $0x78] sm:$0xff]
    %v146 = vld [vmem:[%s4] sm:$0x1]
    %v148 = vlaneseq
    %v149 = vshrl.u32 %v148, 7
    %v150 = vsub.s32 0, %v149
    %v151 = vrot.slane %v146, %v150
    %153 = vmatprep.subr.mxu0 0.0
    %154 = vmatpush1.msra.mxu0 %v145
    %155 = vmatprep.subr.mxu0 0.0
    %156 = vmatpush1.msra.mxu0 %v144
    %157 = vmatprep.subr.mxu0 0.0
    %158 = vmatpush1.msra.mxu0 %v143
    %159 = vmatprep.subr.mxu0 0.0
    %160 = vmatpush1.msra.mxu0 %v142
    %161 = vmatprep.subr.mxu0 0.0
    %162 = vmatpush1.msra.mxu0 %v141
    %163 = vmatprep.subr.mxu0 0.0
    %164 = vmatpush1.msra.mxu0 %v140
    %165 = vmatprep.subr.mxu0 0.0
    %166 = vmatpush1.msra.mxu0 %v139
    %167 = vmatprep.subr.mxu0 0.0
    %168 = vmatpush1.msra.mxu0 %v138
    %169 = vmatprep.subr.mxu0 0.0
    %170 = vmatpush1.msra.mxu0 %v137
    %171 = vmatprep.subr.mxu0 0.0
    %172 = vmatpush1.msra.mxu0 %v136
    %173 = vmatprep.subr.mxu0 0.0
    %174 = vmatpush1.msra.mxu0 %v135
    %175 = vmatprep.subr.mxu0 0.0
    %176 = vmatpush1.msra.mxu0 %v134
    %177 = vmatprep.subr.mxu0 0.0
    %178 = vmatpush1.msra.mxu0 %v133
    %179 = vmatprep.subr.mxu0 0.0
    %180 = vmatpush1.msra.mxu0 %v132
    %181 = vmatprep.subr.mxu0 0.0
    %182 = vmatpush1.msra.mxu0 %v131
    %183 = vmatprep.subr.mxu0 0.0
    %184 = vmatpush1.msra.mxu0 %v130
    %185 = vmatprep.subr.mxu0 0.0
    %186 = vmatpush2.msra.mxu0 0.0
    %187 = vmatprep.subr.mxu0 0.0
    %188 = vmatpush2.msra.mxu0 0.0
    %189 = vmatprep.subr.mxu0 0.0
    %190 = vmatpush2.msra.mxu0 0.0
    %191 = vmatprep.subr.mxu0 0.0
    %192 = vmatpush2.msra.mxu0 0.0
    %193 = vmatprep.subr.mxu0 0.0
    %194 = vmatpush2.msra.mxu0 0.0
    %195 = vmatprep.subr.mxu0 0.0
    %196 = vmatpush2.msra.mxu0 0.0
    %197 = vmatprep.subr.mxu0 0.0
    %198 = vmatpush2.msra.mxu0 0.0
    %199 = vmatprep.subr.mxu0 0.0
    %200 = vmatpush2.msra.mxu0 0.0
    %201 = vmatprep.subr.mxu0 0.0
    %202 = vmatpush2.msra.mxu0 0.0
    %203 = vmatprep.subr.mxu0 0.0
    %204 = vmatpush2.msra.mxu0 0.0
    %205 = vmatprep.subr.mxu0 0.0
    %206 = vmatpush2.msra.mxu0 0.0
    %207 = vmatprep.subr.mxu0 0.0
    %208 = vmatpush2.msra.mxu0 0.0
    %209 = vmatprep.subr.mxu0 0.0
    %210 = vmatpush2.msra.mxu0 0.0
    %211 = vmatprep.subr.mxu0 0.0
    %212 = vmatpush2.msra.mxu0 0.0
    %213 = vmatprep.subr.mxu0 0.0
    %214 = vmatpush2.msra.mxu0 0.0
    %215 = vmatprep.subr.mxu0 0.0
    %216 = vmatpush2.msra.mxu0 0.0
    %217 = vmatprep.mubr.f32.mxu0 0.0
    %218 = vmatmul.mubr.f32.gmra.mxu0 %v129
    %v219 = vpop.f32.mrf.mxu0
    %v220 = vadd.f32 %v151, %v219
    %v221 = vpop.f32.mrf.mxu0
    %222 = vdwg.mxu0
    %v223 = vmax.f32 %v220, 0.0
    %v224 = vld [vmem:[%s5] sm:$0xff]
    %v225 = vld [vmem:[%s5 + $0x8] sm:$0xff]
    %v226 = vld [vmem:[%s5 + $0x10] sm:$0xff]
    %v227 = vld [vmem:[%s5 + $0x18] sm:$0xff]
    %v228 = vld [vmem:[%s5 + $0x20] sm:$0xff]
    %v229 = vld [vmem:[%s5 + $0x28] sm:$0xff]
    %v230 = vld [vmem:[%s5 + $0x30] sm:$0xff]
    %v231 = vld [vmem:[%s5 + $0x38] sm:$0xff]
    %v232 = vld [vmem:[%s5 + $0x40] sm:$0xff]
    %v233 = vld [vmem:[%s5 + $0x48] sm:$0xff]
    %v234 = vld [vmem:[%s5 + $0x50] sm:$0xff]
    %v235 = vld [vmem:[%s5 + $0x58] sm:$0xff]
    %v236 = vld [vmem:[%s5 + $0x60] sm:$0xff]
    %v237 = vld [vmem:[%s5 + $0x68] sm:$0xff]
    %v238 = vld [vmem:[%s5 + $0x70] sm:$0xff]
    %v239 = vld [vmem:[%s5 + $0x78] sm:$0xff]
    %v240 = vld [vmem:[%s6] sm:$0x1]
    %v242 = vlaneseq
    %v243 = vshrl.u32 %v242, 7
    %v244 = vsub.s32 0, %v243
    %v245 = vrot.slane %v240, %v244
    %247 = vmatprep.subr.mxu0 0.0
    %248 = vmatpush1.msra.mxu0 %v239
    %249 = vmatprep.subr.mxu0 0.0
    %250 = vmatpush1.msra.mxu0 %v238
    %251 = vmatprep.subr.mxu0 0.0
    %252 = vmatpush1.msra.mxu0 %v237
    %253 = vmatprep.subr.mxu0 0.0
    %254 = vmatpush1.msra.mxu0 %v236
    %255 = vmatprep.subr.mxu0 0.0
    %256 = vmatpush1.msra.mxu0 %v235
    %257 = vmatprep.subr.mxu0 0.0
    %258 = vmatpush1.msra.mxu0 %v234
    %259 = vmatprep.subr.mxu0 0.0
    %260 = vmatpush1.msra.mxu0 %v233
    %261 = vmatprep.subr.mxu0 0.0
    %262 = vmatpush1.msra.mxu0 %v232
    %263 = vmatprep.subr.mxu0 0.0
    %264 = vmatpush1.msra.mxu0 %v231
    %265 = vmatprep.subr.mxu0 0.0
    %266 = vmatpush1.msra.mxu0 %v230
    %267 = vmatprep.subr.mxu0 0.0
    %268 = vmatpush1.msra.mxu0 %v229
    %269 = vmatprep.subr.mxu0 0.0
    %270 = vmatpush1.msra.mxu0 %v228
    %271 = vmatprep.subr.mxu0 0.0
    %272 = vmatpush1.msra.mxu0 %v227
    %273 = vmatprep.subr.mxu0 0.0
    %274 = vmatpush1.msra.mxu0 %v226
    %275 = vmatprep.subr.mxu0 0.0
    %276 = vmatpush1.msra.mxu0 %v225
    %277 = vmatprep.subr.mxu0 0.0
    %278 = vmatpush1.msra.mxu0 %v224
    %279 = vmatprep.subr.mxu0 0.0
    %280 = vmatpush2.msra.mxu0 0.0
    %281 = vmatprep.subr.mxu0 0.0
    %282 = vmatpush2.msra.mxu0 0.0
    %283 = vmatprep.subr.mxu0 0.0
    %284 = vmatpush2.msra.mxu0 0.0
    %285 = vmatprep.subr.mxu0 0.0
    %286 = vmatpush2.msra.mxu0 0.0
    %287 = vmatprep.subr.mxu0 0.0
    %288 = vmatpush2.msra.mxu0 0.0
    %289 = vmatprep.subr.mxu0 0.0
    %290 = vmatpush2.msra.mxu0 0.0
    %291 = vmatprep.subr.mxu0 0.0
    %292 = vmatpush2.msra.mxu0 0.0
    %293 = vmatprep.subr.mxu0 0.0
    %294 = vmatpush2.msra.mxu0 0.0
    %295 = vmatprep.subr.mxu0 0.0
    %296 = vmatpush2.msra.mxu0 0.0
    %297 = vmatprep.subr.mxu0 0.0
    %298 = vmatpush2.msra.mxu0 0.0
    %299 = vmatprep.subr.mxu0 0.0
    %300 = vmatpush2.msra.mxu0 0.0
    %301 = vmatprep.subr.mxu0 0.0
    %302 = vmatpush2.msra.mxu0 0.0
    %303 = vmatprep.subr.mxu0 0.0
    %304 = vmatpush2.msra.mxu0 0.0
    %305 = vmatprep.subr.mxu0 0.0
    %306 = vmatpush2.msra.mxu0 0.0
    %307 = vmatprep.subr.mxu0 0.0
    %308 = vmatpush2.msra.mxu0 0.0
    %309 = vmatprep.subr.mxu0 0.0
    %310 = vmatpush2.msra.mxu0 0.0
    %311 = vmatprep.mubr.f32.mxu0 0.0
    %312 = vmatmul.mubr.f32.gmra.mxu0 %v223
    %v313 = vpop.f32.mrf.mxu0
    %v314 = vadd.f32 %v245, %v313
    %v315 = vpop.f32.mrf.mxu0
    %316 = vdwg.mxu0
    %317 = vst.msk [vmem:[#allocation5] sm:$0xff] %vm55, %v314
    // Predicated region
    $region34: #{vae_forward_deterministic.1} parent=1 // pred_check
      _
    $region35: #{vae_forward_deterministic.1} parent=1 // pred_check_branch
      %319 = sbr.rel (0) target = $region37
    $region36: #{vae_forward_deterministic.1} parent=1 // pred_region
      %s321 = ssub.s32 128, 128
      %322 = vsyncadd [#allocation4], %s321
      %s324 = sshll.u32 [#allocation5], 4
      %s325 = int_to_ptr.vmem [resolvable:$true] %s324
      %327 = dma.vmem_to_hbm [thread:$0]  %s325, 128, %s7, [#allocation4]
    $region37: #{vae_forward_deterministic.1} parent=1 // pred_fallthru
      _
    // Predicated region
    $region38: #{vae_forward_deterministic.1} parent=1 // pred_check
      _
    $region39: #{vae_forward_deterministic.1} parent=1 // pred_check_branch
      %329 = sbr.rel (0) target = $region41
    $region40: #{vae_forward_deterministic.1} parent=1 // pred_region
      %330 = dma.done [#allocation4], 128
    $region41: #{vae_forward_deterministic.1} parent=1 // pred_fallthru
      _
    %331 = vsyncpa [#allocation3], 1
    %332 = vsyncpa [#allocation4], 1

</llo_original>
